<compile_context>
chip_gen: v5e
topology: v5e:2x2
jax: 0.10.0
libtpu: 0.0.40
codegen_flags: <defaults>
</compile_context>

<pallas_src>
import functools

import jax
import jax.numpy as jnp
from jax.experimental import pallas as pl
from jax.experimental.pallas import tpu as pltpu

_INV_SQRT2 = 0.7071067811865476


def _erf_f32(x):
    # Abramowitz & Stegun 7.1.26 rational approximation, |abs err| <= 1.5e-7.
    # The 1/(1+p*|x|) goes through the EUP (approx reciprocal) plus one
    # Newton-Raphson step, keeping the expensive chain off the saturated VALU
    # while recovering ~fp32 accuracy.
    p = 0.3275911
    a1, a2, a3, a4, a5 = (0.254829592, -0.284496736, 1.421413741,
                          -1.453152027, 1.061405429)
    ax = jnp.abs(x)
    d = 1.0 + p * ax
    t = pl.reciprocal(d, approx=True)     # EUP slot
    t = t * (2.0 - d * t)                 # one NR step -> ~fp32-accurate 1/d
    poly = ((((a5 * t + a4) * t + a3) * t + a2) * t + a1) * t
    y = 1.0 - poly * jnp.exp(-ax * ax)    # exp also on the EUP
    return jnp.where(x < 0.0, -y, y)


def _gelu_exact_f32(x):
    # Exact (erf-based) GELU, matching HF ACT2FN["gelu"] / torch.nn.GELU().
    return 0.5 * x * (1.0 + _erf_f32(x * _INV_SQRT2))


# ----------------------------- Pallas kernel --------------------------------
def _head_transform_kernel(x_ref,   # (tm, H) activations tile
                           w_ref,   # (H, H)  pre-transposed dense weight (in, out)
                           b_ref,   # (1, H)  dense bias
                           g_ref,   # (1, H)  LayerNorm gamma
                           bt_ref,  # (1, H)  LayerNorm beta
                           o_ref,   # (tm, H)
                           *, eps: float, mm_dtype):
    # Dense: MXU matmul; operands in mm_dtype (bf16 fast path), fp32 accumulate.
    x = x_ref[...].astype(mm_dtype)
    y = jnp.dot(x, w_ref[...], preferred_element_type=jnp.float32)
    y = y + b_ref[...].astype(jnp.float32)

    # Activation (exact GELU), fp32.
    y = _gelu_exact_f32(y)

    # LayerNorm over the hidden dim: single-pass fp32 statistics.
    inv_h = 1.0 / y.shape[-1]
    s1 = jnp.sum(y, axis=-1, keepdims=True)
    s2 = jnp.sum(y * y, axis=-1, keepdims=True)
    mean = s1 * inv_h
    var = jnp.maximum(s2 * inv_h - mean * mean, 0.0)
    y = (y - mean) * jax.lax.rsqrt(var + eps)
    y = y * g_ref[...].astype(jnp.float32) + bt_ref[...].astype(jnp.float32)

    o_ref[...] = y.astype(o_ref.dtype)


# ------------------------------ wrapper --------------------------------------
def _round_up(x, m):
    return (x + m - 1) // m * m


def layoutlm_prediction_head_transform(hidden_states, weight, bias, gamma, beta,
                                       *, layer_norm_eps=1e-12, block_rows=512,
                                       matmul_in_bf16=None):
    """Fused dense -> GELU -> LayerNorm.

    `weight` is the PyTorch nn.Linear weight with shape (H_out, H_in); it is
    pre-transposed once here so the kernel never transposes.  If
    `matmul_in_bf16` is True (or the inputs are already bf16), the MXU
    operands are bf16 with fp32 accumulation; default keeps the input dtype.
    """
    orig_shape = hidden_states.shape
    H = orig_shape[-1]
    x2d = hidden_states.reshape(-1, H)
    N = x2d.shape[0]
    in_dt = x2d.dtype

    if matmul_in_bf16 is None:
        matmul_in_bf16 = (in_dt == jnp.bfloat16)
    mm_dtype = jnp.dtype(jnp.bfloat16) if matmul_in_bf16 else jnp.dtype(in_dt)

    # Row tile: multiple of the sublane pack (16 for bf16, 8 otherwise).
    sub = 16 if in_dt == jnp.bfloat16 else 8
    tm = min(block_rows, _round_up(N, sub))
    # Keep >= 2 grid steps when there's enough work so the "parallel" row axis
    # can be split across v7x's two TensorCores (harmless on v5e/v6e).
    if N > sub and pl.cdiv(N, tm) < 2:
        tm = _round_up(pl.cdiv(N, 2), sub)
    grid_m = pl.cdiv(N, tm)   # ragged last block handled by Pallas (no jnp.pad)

    w_t = jnp.transpose(weight).astype(mm_dtype)   # (H_in, H_out), one-time
    b_row = bias.reshape(1, H)
    g_row = gamma.reshape(1, H)
    bt_row = beta.reshape(1, H)

    # Explicit VMEM budget: double-buffered x/out tiles + resident params +
    # fp32 GELU/LN temporaries.  Floor 32 MiB (covers v5e's 16 MiB scoped
    # default), cap 64 MiB (fits v7x physical VMEM).
    esz = lambda dt: jnp.dtype(dt).itemsize
    param_bytes = H * H * esz(mm_dtype) + H * (esz(bias.dtype)
                                               + esz(gamma.dtype)
                                               + esz(beta.dtype))
    vmem_bytes = (2 * tm * H * (esz(in_dt) + esz(in_dt))   # x + out, double-buffered
                  + 2 * param_bytes
                  + 6 * tm * H * 4)                         # fp32 temporaries (generous)
    vmem_bytes = int(min(max(vmem_bytes, 32 << 20), 64 << 20))

    kernel = functools.partial(_head_transform_kernel,
                               eps=layer_norm_eps, mm_dtype=mm_dtype)

    out2d = pl.pallas_call(
        kernel,
        out_shape=jax.ShapeDtypeStruct((N, H), in_dt),
        grid_spec=pltpu.PrefetchScalarGridSpec(
            num_scalar_prefetch=0,
            grid=(grid_m,),
            in_specs=[
                pl.BlockSpec((tm, H), lambda i: (i, 0)),   # activations (streamed)
                pl.BlockSpec((H, H), lambda i: (0, 0)),    # W^T (VMEM-resident)
                pl.BlockSpec((1, H), lambda i: (0, 0)),    # bias
                pl.BlockSpec((1, H), lambda i: (0, 0)),    # gamma
                pl.BlockSpec((1, H), lambda i: (0, 0)),    # beta
            ],
            out_specs=pl.BlockSpec((tm, H), lambda i: (i, 0)),
        ),
        compiler_params=pltpu.CompilerParams(
            dimension_semantics=("parallel",),
            vmem_limit_bytes=vmem_bytes),
    )(x2d, w_t, b_row, g_row, bt_row)

    return out2d.reshape(orig_shape)


# --------------------------- pure-JAX reference -------------------------------
def head_transform_ref(x, weight, bias, gamma, beta, eps=1e-12):
    y = x @ weight.T + bias
    y = 0.5 * y * (1.0 + jax.scipy.special.erf(y * _INV_SQRT2))   # exact GELU
    mean = y.mean(-1, keepdims=True)
    var = ((y - mean) ** 2).mean(-1, keepdims=True)
    return (y - mean) / jnp.sqrt(var + eps) * gamma + beta


# --------------------------------- main ---------------------------------------
if __name__ == "__main__":
    # Small LayoutLM-style config (real config: S=512, H=768).
    B, S, H = 2, 8, 32
    EPS = 1e-12

    key = jax.random.PRNGKey(0)
    k_x, k_w, k_b, k_g, k_bt = jax.random.split(key, 5)

    hidden_states = jax.random.normal(k_x, (B, S, H), dtype=jnp.float32)

    # Deterministic synthetic parameters (PyTorch (out, in) weight layout).
    weight = 0.05 * jax.random.normal(k_w, (H, H), dtype=jnp.float32)
    bias = 0.01 * jax.random.normal(k_b, (H,), dtype=jnp.float32)
    gamma = 1.0 + 0.05 * jax.random.normal(k_g, (H,), dtype=jnp.float32)
    beta = 0.05 * jax.random.normal(k_bt, (H,), dtype=jnp.float32)

    ref = head_transform_ref(hidden_states, weight, bias, gamma, beta, eps=EPS)

    # 1) Exact path (fp32 MXU operands) — matches PyTorch fp32 semantics.
    out = layoutlm_prediction_head_transform(
        hidden_states, weight, bias, gamma, beta,
        layer_norm_eps=EPS, matmul_in_bf16=False)
    out = jax.block_until_ready(out)
    assert out.shape == (B, S, H)
    err = jnp.max(jnp.abs(out - ref))
    assert jnp.allclose(out, ref, atol=1e-4, rtol=1e-4), f"fp32 path max err {err}"

    # 2) Fast path (bf16 MXU operands, fp32 accumulate + fp32 GELU/LN math).
    out_bf = layoutlm_prediction_head_transform(
        hidden_states, weight, bias, gamma, beta,
        layer_norm_eps=EPS, matmul_in_bf16=True)
    out_bf = jax.block_until_ready(out_bf)
    err_bf = jnp.max(jnp.abs(out_bf - ref))
    assert jnp.allclose(out_bf, ref, atol=5e-2, rtol=5e-2), \
        f"bf16 path max err {err_bf}"

    # 3) Ragged row count (N not a multiple of the tile) — no wrapper padding,
    #    Pallas masks the tail block.
    hs_rag = hidden_states[:, :7, :]   # N = 14 rows
    out_rag = layoutlm_prediction_head_transform(
        hs_rag, weight, bias, gamma, beta, layer_norm_eps=EPS,
        matmul_in_bf16=False)
    out_rag = jax.block_until_ready(out_rag)
    ref_rag = head_transform_ref(hs_rag, weight, bias, gamma, beta, eps=EPS)
    err_rag = jnp.max(jnp.abs(out_rag - ref_rag))
    assert jnp.allclose(out_rag, ref_rag, atol=1e-4, rtol=1e-4), \
        f"ragged path max err {err_rag}"

    print("KERNEL_OK")
</pallas_src>

<mosaic_0001>
module attributes {stable_mosaic.version = 11 : i64} {
  func.func @_head_transform_kernel(%arg0: i32, %arg1: memref<8x32xf32, #tpu.memory_space<vmem>>, %arg2: memref<32x32xf32, #tpu.memory_space<vmem>>, %arg3: memref<1x32xf32, #tpu.memory_space<vmem>>, %arg4: memref<1x32xf32, #tpu.memory_space<vmem>>, %arg5: memref<1x32xf32, #tpu.memory_space<vmem>>, %arg6: memref<8x32xf32, #tpu.memory_space<vmem>>) attributes {dimension_semantics = [#tpu.dimension_semantics<parallel>], iteration_bounds = array<i64: 2>, scalar_prefetch = 0 : i64, scratch_operands = 0 : i64, tpu.core_type = #tpu.core_type<tc>, window_params = [{transform_indices = @transform_0, window_bounds = array<i64: 8, 32>}, {pipeline_mode = #tpu.pipeline_mode<synchronous>, transform_indices = @transform_1, window_bounds = array<i64: 32, 32>}, {pipeline_mode = #tpu.pipeline_mode<synchronous>, transform_indices = @transform_2, window_bounds = array<i64: 1, 32>}, {pipeline_mode = #tpu.pipeline_mode<synchronous>, transform_indices = @transform_3, window_bounds = array<i64: 1, 32>}, {pipeline_mode = #tpu.pipeline_mode<synchronous>, transform_indices = @transform_4, window_bounds = array<i64: 1, 32>}, {transform_indices = @transform_5, window_bounds = array<i64: 8, 32>}]} {
    %c0 = arith.constant 0 : index
    %c0_0 = arith.constant 0 : index
    %0 = vector.load %arg1[%c0, %c0_0] : memref<8x32xf32, #tpu.memory_space<vmem>>, vector<8x32xf32>
    %c0_1 = arith.constant 0 : index
    %c0_2 = arith.constant 0 : index
    %1 = vector.load %arg2[%c0_1, %c0_2] : memref<32x32xf32, #tpu.memory_space<vmem>>, vector<32x32xf32>
    %cst = arith.constant dense<0.000000e+00> : vector<8x32xf32>
    %2 = tpu.matmul %0, %1, %cst {dimension_numbers = #tpu.dot_dimension_numbers<[1], [0], [0], [1], [0, 0, 1, 1], [], []>} : vector<8x32xf32>, vector<32x32xf32>, vector<8x32xf32> -> vector<8x32xf32>
    %c0_3 = arith.constant 0 : index
    %c0_4 = arith.constant 0 : index
    %3 = vector.load %arg3[%c0_3, %c0_4] : memref<1x32xf32, #tpu.memory_space<vmem>>, vector<1x32xf32>
    %4 = vector.broadcast %3 : vector<1x32xf32> to vector<8x32xf32>
    %5 = arith.addf %2, %4 : vector<8x32xf32>
    %cst_5 = arith.constant 5.000000e-01 : f32
    %6 = vector.broadcast %cst_5 : f32 to vector<8x32xf32>
    %7 = arith.mulf %6, %5 : vector<8x32xf32>
    %cst_6 = arith.constant 0.707106769 : f32
    %8 = vector.broadcast %cst_6 : f32 to vector<8x32xf32>
    %9 = arith.mulf %5, %8 : vector<8x32xf32>
    %10 = math.absf %9 : vector<8x32xf32>
    %cst_7 = arith.constant 0.327591091 : f32
    %11 = vector.broadcast %cst_7 : f32 to vector<8x32xf32>
    %12 = arith.mulf %11, %10 : vector<8x32xf32>
    %cst_8 = arith.constant 1.000000e+00 : f32
    %13 = vector.broadcast %cst_8 : f32 to vector<8x32xf32>
    %14 = arith.addf %13, %12 : vector<8x32xf32>
    %15 = tpu.reciprocal %14 {approx = true} : vector<8x32xf32> -> vector<8x32xf32>
    %16 = arith.mulf %14, %15 : vector<8x32xf32>
    %cst_9 = arith.constant 2.000000e+00 : f32
    %17 = vector.broadcast %cst_9 : f32 to vector<8x32xf32>
    %18 = arith.subf %17, %16 : vector<8x32xf32>
    %19 = arith.mulf %15, %18 : vector<8x32xf32>
    %cst_10 = arith.constant 1.06140542 : f32
    %20 = vector.broadcast %cst_10 : f32 to vector<8x32xf32>
    %21 = arith.mulf %20, %19 : vector<8x32xf32>
    %cst_11 = arith.constant -1.45315206 : f32
    %22 = vector.broadcast %cst_11 : f32 to vector<8x32xf32>
    %23 = arith.addf %21, %22 : vector<8x32xf32>
    %24 = arith.mulf %23, %19 : vector<8x32xf32>
    %cst_12 = arith.constant 1.42141378 : f32
    %25 = vector.broadcast %cst_12 : f32 to vector<8x32xf32>
    %26 = arith.addf %24, %25 : vector<8x32xf32>
    %27 = arith.mulf %26, %19 : vector<8x32xf32>
    %cst_13 = arith.constant -0.284496725 : f32
    %28 = vector.broadcast %cst_13 : f32 to vector<8x32xf32>
    %29 = arith.addf %27, %28 : vector<8x32xf32>
    %30 = arith.mulf %29, %19 : vector<8x32xf32>
    %cst_14 = arith.constant 0.254829586 : f32
    %31 = vector.broadcast %cst_14 : f32 to vector<8x32xf32>
    %32 = arith.addf %30, %31 : vector<8x32xf32>
    %33 = arith.mulf %32, %19 : vector<8x32xf32>
    %cst_15 = arith.constant 0.000000e+00 : f32
    %34 = vector.broadcast %cst_15 : f32 to vector<8x32xf32>
    %35 = arith.subf %34, %10 : vector<8x32xf32>
    %36 = arith.mulf %35, %10 : vector<8x32xf32>
    %37 = math.exp %36 : vector<8x32xf32>
    %38 = arith.mulf %33, %37 : vector<8x32xf32>
    %cst_16 = arith.constant 1.000000e+00 : f32
    %39 = vector.broadcast %cst_16 : f32 to vector<8x32xf32>
    %40 = arith.subf %39, %38 : vector<8x32xf32>
    %cst_17 = arith.constant 0.000000e+00 : f32
    %41 = vector.broadcast %cst_17 : f32 to vector<8x32xf32>
    %42 = arith.cmpf olt, %9, %41 : vector<8x32xf32>
    %cst_18 = arith.constant 0.000000e+00 : f32
    %43 = vector.broadcast %cst_18 : f32 to vector<8x32xf32>
    %44 = arith.subf %43, %40 : vector<8x32xf32>
    %45 = arith.select %42, %44, %40 : vector<8x32xi1>, vector<8x32xf32>
    %cst_19 = arith.constant 1.000000e+00 : f32
    %46 = vector.broadcast %cst_19 : f32 to vector<8x32xf32>
    %47 = arith.addf %46, %45 : vector<8x32xf32>
    %48 = arith.mulf %7, %47 : vector<8x32xf32>
    %cst_20 = arith.constant dense<0.000000e+00> : vector<8xf32>
    %49 = vector.multi_reduction <add>, %48, %cst_20 [1] : vector<8x32xf32> to vector<8xf32>
    %50 = vector.shape_cast %49 : vector<8xf32> to vector<8x1xf32>
    %51 = arith.mulf %48, %48 : vector<8x32xf32>
    %cst_21 = arith.constant dense<0.000000e+00> : vector<8xf32>
    %52 = vector.multi_reduction <add>, %51, %cst_21 [1] : vector<8x32xf32> to vector<8xf32>
    %53 = vector.shape_cast %52 : vector<8xf32> to vector<8x1xf32>
    %cst_22 = arith.constant 3.125000e-02 : f32
    %54 = vector.broadcast %cst_22 : f32 to vector<8x1xf32>
    %55 = arith.mulf %50, %54 : vector<8x1xf32>
    %cst_23 = arith.constant 3.125000e-02 : f32
    %56 = vector.broadcast %cst_23 : f32 to vector<8x1xf32>
    %57 = arith.mulf %53, %56 : vector<8x1xf32>
    %58 = arith.mulf %55, %55 : vector<8x1xf32>
    %59 = arith.subf %57, %58 : vector<8x1xf32>
    %cst_24 = arith.constant 0.000000e+00 : f32
    %60 = vector.broadcast %cst_24 : f32 to vector<8x1xf32>
    %61 = arith.maximumf %59, %60 : vector<8x1xf32>
    %62 = vector.broadcast %55 : vector<8x1xf32> to vector<8x32xf32>
    %63 = arith.subf %48, %62 : vector<8x32xf32>
    %cst_25 = arith.constant 9.99999996E-13 : f32
    %64 = vector.broadcast %cst_25 : f32 to vector<8x1xf32>
    %65 = arith.addf %61, %64 : vector<8x1xf32>
    %66 = math.rsqrt %65 : vector<8x1xf32>
    %67 = vector.broadcast %66 : vector<8x1xf32> to vector<8x32xf32>
    %68 = arith.mulf %63, %67 : vector<8x32xf32>
    %c0_26 = arith.constant 0 : index
    %c0_27 = arith.constant 0 : index
    %69 = vector.load %arg4[%c0_26, %c0_27] : memref<1x32xf32, #tpu.memory_space<vmem>>, vector<1x32xf32>
    %70 = vector.broadcast %69 : vector<1x32xf32> to vector<8x32xf32>
    %71 = arith.mulf %68, %70 : vector<8x32xf32>
    %c0_28 = arith.constant 0 : index
    %c0_29 = arith.constant 0 : index
    %72 = vector.load %arg5[%c0_28, %c0_29] : memref<1x32xf32, #tpu.memory_space<vmem>>, vector<1x32xf32>
    %73 = vector.broadcast %72 : vector<1x32xf32> to vector<8x32xf32>
    %74 = arith.addf %71, %73 : vector<8x32xf32>
    %c0_30 = arith.constant 0 : index
    %c0_31 = arith.constant 0 : index
    %75 = vector.load %arg6[%c0_30, %c0_31] : memref<8x32xf32, #tpu.memory_space<vmem>>, vector<8x32xf32>
    tpu.vector_store %arg6[%c0_30, %c0_31], %74 {strides = array<i32>} : memref<8x32xf32, #tpu.memory_space<vmem>>, vector<8x32xf32>,
    return
  }
  func.func @transform_0(%arg0: i32) -> (i32, i32) {
    %c0_i32 = arith.constant 0 : i32
    %c0_i32_0 = arith.constant 0 : i32
    return %arg0, %c0_i32 : i32, i32
  }
  func.func @transform_1(%arg0: i32) -> (i32, i32) {
    %c0_i32 = arith.constant 0 : i32
    %c0_i32_0 = arith.constant 0 : i32
    %c0_i32_1 = arith.constant 0 : i32
    return %c0_i32, %c0_i32_0 : i32, i32
  }
  func.func @transform_2(%arg0: i32) -> (i32, i32) {
    %c0_i32 = arith.constant 0 : i32
    %c0_i32_0 = arith.constant 0 : i32
    %c0_i32_1 = arith.constant 0 : i32
    return %c0_i32, %c0_i32_0 : i32, i32
  }
  func.func @transform_3(%arg0: i32) -> (i32, i32) {
    %c0_i32 = arith.constant 0 : i32
    %c0_i32_0 = arith.constant 0 : i32
    %c0_i32_1 = arith.constant 0 : i32
    return %c0_i32, %c0_i32_0 : i32, i32
  }
  func.func @transform_4(%arg0: i32) -> (i32, i32) {
    %c0_i32 = arith.constant 0 : i32
    %c0_i32_0 = arith.constant 0 : i32
    %c0_i32_1 = arith.constant 0 : i32
    return %c0_i32, %c0_i32_0 : i32, i32
  }
  func.func @transform_5(%arg0: i32) -> (i32, i32) {
    %c0_i32 = arith.constant 0 : i32
    %c0_i32_0 = arith.constant 0 : i32
    return %arg0, %c0_i32 : i32, i32
  }
}

</mosaic_0001>

<llo_original>
// kernel: tpu_custom_call.1
$region0: #{tpu_custom_call.1}
  #allocation0 [shape = 'u32[]', space=smem, size = 0x4, offset = 0x4, fixed_abs, tag = 'smem constant byte address 0x4 - core index']
  #allocation1 [shape = 'u32[72,128]{1,0:T(1,128)}', space=vmem, size = 0x9000, scoped, tag = 'internal scratch']
  %s0 = inlined_call_operand.hbm [shape: f32[16,32], index: 0, kind: input, shape index: {}]
  %s1 = inlined_call_operand.hbm [shape: f32[32,32], index: 1, kind: input, shape index: {}]
  %s2 = inlined_call_operand.vmem [shape: f32[1,32], index: 2, kind: input, shape index: {}]
  %s3 = inlined_call_operand.vmem [shape: f32[1,32], index: 3, kind: input, shape index: {}]
  %s4 = inlined_call_operand.vmem [shape: f32[1,32], index: 4, kind: input, shape index: {}]
  %s5 = inlined_call_operand.hbm [shape: f32[16,32], index: 5, kind: output, shape index: {}]
  %s6 = sld [smem:[#allocation0]]
  $region61: #{tpu_custom_call.1} parent=0
    _
  %s8 = ssub.s32 1, %s6
  %s9 = scalar_select 0, %s8, %s6
  $region1: #{tpu_custom_call.1} parent=0
    #allocation2 [shape = 'u8[8192]{0}', space=vmem, size = 0x2000, scoped, tag = 'input window, operand 0']
    #allocation3 [shape = 's32[2]{0}', space=sflag, size = 0x8, scoped, tag = 'scoped memory for tpu_custom_call.1']
    #allocation4 [shape = 's32[2]{0}', space=sflag, size = 0x8, scoped, tag = 'scoped memory for tpu_custom_call.1']
    #allocation5 [shape = 'u8[16384]{0}', space=vmem, size = 0x4000, scoped, tag = 'input window, operand 1, single buffered']
    #allocation6 [shape = 's32[1]{0}', space=sflag, size = 0x4, scoped, tag = 'scoped memory for tpu_custom_call.1']
    #allocation7 [shape = 'u8[8192]{0}', space=vmem, size = 0x2000, scoped, tag = 'output window, operand 0']
    %10 = vsyncpa [#allocation3], 0
    %s11 = scalar_lea.sflag [#allocation3], 1
    %12 = vsyncpa %s11, 0
    %13 = vsyncpa [#allocation6], 0
    %14 = vsyncpa [#allocation4], 0
    %s15 = scalar_lea.sflag [#allocation4], 1
    %16 = vsyncpa %s15, 0
    loop: start=0, step=1, limit=4
    $region2: #{tpu_custom_call.1} parent=1 // loop_pre_header
      _
    $region3: #{tpu_custom_call.1} parent=1 // loop_header
      %s18 = sphi 0, %s22
      %p19 = scmp.ge.s32.totalorder %s18, 4
      %s28 = sphi 0, %s30
      %s31 = sphi 0, %s28
      %s32 = sphi 0, %s31
      %s48 = sphi 0, %s32
      %s52 = sphi 0, %s52
      %s54 = sphi 0, %s52
      %s55 = sphi 0, %s54
      %s69 = sphi 0, %s55
      %s73 = sphi 0, %s73
      %s75 = sphi 0, %s73
      %s76 = sphi 0, %s75
      %s90 = sphi 0, %s76
      %s94 = sphi 0, %s94
      %s96 = sphi 0, %s94
      %s97 = sphi 0, %s96
      %s111 = sphi 0, %s97
      %s115 = sphi 0, %s115
      %s117 = sphi 0, %s115
      %s118 = sphi 0, %s117
      %s132 = sphi 0, %s118
      %s138 = sphi 0, %s140
      %s141 = sphi 0, %s138
      %s142 = sphi 0, %s141
      %s158 = sphi 0, %s142
    $region4: #{tpu_custom_call.1} parent=1 // loop_header_branch
      %21 = sbr.rel (%p19) target = $region8
    $region5: #{tpu_custom_call.1} parent=1 // loop_body
      %s23 = ssub.s32 %s18, 1
      %s24 = ssub.s32 %s18, 2
      %s25 = sadd.s32 %s18, 1
      %s26 = ssub.s32 %s18, %s25
      %p27 = scmp.eq.s32.totalorder %s26, 0
      %s29 = sadd.s32 %s28, 1
      %s30 = scalar_select %p27, %s28, %s29
      %p33 = pneg %p27
      %p34 = scmp.eq.s32.totalorder %s18, 1
      %p35 = por %p33, %p34
      %p36 = scmp.ne.s32.totalorder %s28, %s31
      %p37 = scmp.eq.s32.totalorder %s18, 0
      %p38 = por %p36, %p37
      %p39 = scmp.ne.s32.totalorder %s28, %s31
      %p40 = scmp.eq.s32.totalorder %s23, 1
      %p41 = por %p39, %p40
      %p42 = scmp.ne.s32.totalorder %s31, %s32
      %p43 = scmp.eq.s32.totalorder %s23, 0
      %p44 = por %p42, %p43
      %p45 = scmp.ne.s32.totalorder %s31, %s32
      %p46 = scmp.eq.s32.totalorder %s24, 1
      %p47 = por %p45, %p46
      %p49 = scmp.ne.s32.totalorder %s32, %s48
      %p50 = scmp.eq.s32.totalorder %s24, 0
      %p51 = por %p49, %p50
      %s53 = sadd.s32 %s52, 1
      %p56 = scmp.eq.s32.totalorder %s18, 1
      %p57 = scmp.ne.s32.totalorder %s52, %s54
      %p58 = scmp.eq.s32.totalorder %s18, 0
      %p59 = por %p57, %p58
      %p60 = scmp.ne.s32.totalorder %s52, %s54
      %p61 = scmp.eq.s32.totalorder %s23, 1
      %p62 = por %p60, %p61
      %p63 = scmp.ne.s32.totalorder %s54, %s55
      %p64 = scmp.eq.s32.totalorder %s23, 0
      %p65 = por %p63, %p64
      %p66 = scmp.ne.s32.totalorder %s54, %s55
      %p67 = scmp.eq.s32.totalorder %s24, 1
      %p68 = por %p66, %p67
      %p70 = scmp.ne.s32.totalorder %s55, %s69
      %p71 = scmp.eq.s32.totalorder %s24, 0
      %p72 = por %p70, %p71
      %s74 = sadd.s32 %s73, 1
      %p77 = scmp.eq.s32.totalorder %s18, 1
      %p78 = scmp.ne.s32.totalorder %s73, %s75
      %p79 = scmp.eq.s32.totalorder %s18, 0
      %p80 = por %p78, %p79
      %p81 = scmp.ne.s32.totalorder %s73, %s75
      %p82 = scmp.eq.s32.totalorder %s23, 1
      %p83 = por %p81, %p82
      %p84 = scmp.ne.s32.totalorder %s75, %s76
      %p85 = scmp.eq.s32.totalorder %s23, 0
      %p86 = por %p84, %p85
      %p87 = scmp.ne.s32.totalorder %s75, %s76
      %p88 = scmp.eq.s32.totalorder %s24, 1
      %p89 = por %p87, %p88
      %p91 = scmp.ne.s32.totalorder %s76, %s90
      %p92 = scmp.eq.s32.totalorder %s24, 0
      %p93 = por %p91, %p92
      %s95 = sadd.s32 %s94, 1
      %p98 = scmp.eq.s32.totalorder %s18, 1
      %p99 = scmp.ne.s32.totalorder %s94, %s96
      %p100 = scmp.eq.s32.totalorder %s18, 0
      %p101 = por %p99, %p100
      %p102 = scmp.ne.s32.totalorder %s94, %s96
      %p103 = scmp.eq.s32.totalorder %s23, 1
      %p104 = por %p102, %p103
      %p105 = scmp.ne.s32.totalorder %s96, %s97
      %p106 = scmp.eq.s32.totalorder %s23, 0
      %p107 = por %p105, %p106
      %p108 = scmp.ne.s32.totalorder %s96, %s97
      %p109 = scmp.eq.s32.totalorder %s24, 1
      %p110 = por %p108, %p109
      %p112 = scmp.ne.s32.totalorder %s97, %s111
      %p113 = scmp.eq.s32.totalorder %s24, 0
      %p114 = por %p112, %p113
      %s116 = sadd.s32 %s115, 1
      %p119 = scmp.eq.s32.totalorder %s18, 1
      %p120 = scmp.ne.s32.totalorder %s115, %s117
      %p121 = scmp.eq.s32.totalorder %s18, 0
      %p122 = por %p120, %p121
      %p123 = scmp.ne.s32.totalorder %s115, %s117
      %p124 = scmp.eq.s32.totalorder %s23, 1
      %p125 = por %p123, %p124
      %p126 = scmp.ne.s32.totalorder %s117, %s118
      %p127 = scmp.eq.s32.totalorder %s23, 0
      %p128 = por %p126, %p127
      %p129 = scmp.ne.s32.totalorder %s117, %s118
      %p130 = scmp.eq.s32.totalorder %s24, 1
      %p131 = por %p129, %p130
      %p133 = scmp.ne.s32.totalorder %s118, %s132
      %p134 = scmp.eq.s32.totalorder %s24, 0
      %p135 = por %p133, %p134
      %s136 = ssub.s32 %s18, %s25
      %p137 = scmp.eq.s32.totalorder %s136, 0
      %s139 = sadd.s32 %s138, 1
      %s140 = scalar_select %p137, %s138, %s139
      %p143 = pneg %p137
      %p144 = scmp.eq.s32.totalorder %s18, 1
      %p145 = por %p143, %p144
      %p146 = scmp.ne.s32.totalorder %s138, %s141
      %p147 = scmp.eq.s32.totalorder %s18, 0
      %p148 = por %p146, %p147
      %p149 = scmp.ne.s32.totalorder %s138, %s141
      %p150 = scmp.eq.s32.totalorder %s23, 1
      %p151 = por %p149, %p150
      %p152 = scmp.ne.s32.totalorder %s141, %s142
      %p153 = scmp.eq.s32.totalorder %s23, 0
      %p154 = por %p152, %p153
      %p155 = scmp.ne.s32.totalorder %s141, %s142
      %p156 = scmp.eq.s32.totalorder %s24, 1
      %p157 = por %p155, %p156
      %p159 = scmp.ne.s32.totalorder %s142, %s158
      %p160 = scmp.eq.s32.totalorder %s24, 0
      %p161 = por %p159, %p160
      %p162 = scmp.le.s32.totalorder 1, %s18
      %p163 = scmp.lt.s32.totalorder %s18, 3
      %p164 = pnand %p162, %p163
      %p165 = pneg %p164
      // Predicated region
      $region9: #{tpu_custom_call.1} parent=5 // pred_check
        _
      $region10: #{tpu_custom_call.1} parent=5 // pred_check_branch
        %167 = sbr.rel (%p164) target = $region12
      $region11: #{tpu_custom_call.1} parent=5 // pred_region
        %s168 = ssub.s32 %s18, 1
        // Predicated region
        $region13: #{tpu_custom_call.1} parent=11 // pred_check
          %p169 = pneg %p65
        $region14: #{tpu_custom_call.1} parent=11 // pred_check_branch
          %171 = sbr.rel (%p169) target = $region16
        $region15: #{tpu_custom_call.1} parent=11 // pred_region
          %173 = vsyncadd [#allocation6], 0
          %s174 = sshll.u32 %s1, 4
          %s175 = int_to_ptr.hbm [resolvable:$true] %s174
          %s176 = sshll.u32 [#allocation5], 4
          %s177 = int_to_ptr.vmem [resolvable:$true] %s176
          %182 = dma.hbm_to_vmem [thread:$0]  %s175, 512, %s177, [#allocation6], 128, 128, 8
        $region16: #{tpu_custom_call.1} parent=11 // pred_fallthru
          _
        // Predicated region
        $region17: #{tpu_custom_call.1} parent=11 // pred_check
          %p183 = pneg %p86
        $region18: #{tpu_custom_call.1} parent=11 // pred_check_branch
          %185 = sbr.rel (%p183) target = $region20
        $region19: #{tpu_custom_call.1} parent=11 // pred_region
          _
        $region20: #{tpu_custom_call.1} parent=11 // pred_fallthru
          _
        // Predicated region
        $region21: #{tpu_custom_call.1} parent=11 // pred_check
          %p186 = pneg %p107
        $region22: #{tpu_custom_call.1} parent=11 // pred_check_branch
          %188 = sbr.rel (%p186) target = $region24
        $region23: #{tpu_custom_call.1} parent=11 // pred_region
          _
        $region24: #{tpu_custom_call.1} parent=11 // pred_fallthru
          _
        // Predicated region
        $region25: #{tpu_custom_call.1} parent=11 // pred_check
          %p189 = pneg %p128
        $region26: #{tpu_custom_call.1} parent=11 // pred_check_branch
          %191 = sbr.rel (%p189) target = $region28
        $region27: #{tpu_custom_call.1} parent=11 // pred_region
          _
        $region28: #{tpu_custom_call.1} parent=11 // pred_fallthru
          _
      $region12: #{tpu_custom_call.1} parent=5 // pred_fallthru
        _
      %p192 = scmp.lt.s32.totalorder %s18, 2
      // Predicated region
      $region29: #{tpu_custom_call.1} parent=5 // pred_check
        %p193 = pneg %p192
      $region30: #{tpu_custom_call.1} parent=5 // pred_check_branch
        %195 = sbr.rel (%p193) target = $region32
      $region31: #{tpu_custom_call.1} parent=5 // pred_region
        // Predicated region
        $region33: #{tpu_custom_call.1} parent=31 // pred_check
          %p196 = pneg %p38
        $region34: #{tpu_custom_call.1} parent=31 // pred_check_branch
          %198 = sbr.rel (%p196) target = $region36
        $region35: #{tpu_custom_call.1} parent=31 // pred_region
          %s199 = sand.u32 %s28, 1
          %s200 = scalar_lea.sflag [#allocation3], %s199
          %s201 = sand.u32 %s28, 1
          %s202 = smul.addr %s201, 8
          %s203 = scalar_lea.vmem [#allocation2], %s202
          %205 = vsyncadd %s200, 0
          %s206 = smul.addr %s18, 8
          %s207 = scalar_lea.hbm %s0, %s206
          %s209 = sshll.u32 %s207, 4
          %s210 = int_to_ptr.hbm [resolvable:$true] %s209
          %s211 = sshll.u32 %s203, 4
          %s212 = int_to_ptr.vmem [resolvable:$true] %s211
          %214 = dma.hbm_to_vmem [thread:$0]  %s210, 128, %s212, %s200
        $region36: #{tpu_custom_call.1} parent=31 // pred_fallthru
          _
      $region32: #{tpu_custom_call.1} parent=5 // pred_fallthru
        _
      %p215 = scmp.le.s32.totalorder 1, %s18
      %p216 = scmp.lt.s32.totalorder %s18, 3
      %p217 = pnand %p215, %p216
      %p218 = pneg %p217
      // Predicated region
      $region37: #{tpu_custom_call.1} parent=5 // pred_check
        _
      $region38: #{tpu_custom_call.1} parent=5 // pred_check_branch
        %220 = sbr.rel (%p217) target = $region40
      $region39: #{tpu_custom_call.1} parent=5 // pred_region
        %s221 = ssub.s32 %s18, 1
        %s222 = sand.u32 %s31, 1
        %s223 = scalar_lea.sflag [#allocation3], %s222
        %s224 = sand.u32 %s31, 1
        %s225 = smul.addr %s224, 8
        %s226 = scalar_lea.vmem [#allocation2], %s225
        // Predicated region
        $region41: #{tpu_custom_call.1} parent=39 // pred_check
          %p227 = pneg %p44
        $region42: #{tpu_custom_call.1} parent=39 // pred_check_branch
          %229 = sbr.rel (%p227) target = $region44
        $region43: #{tpu_custom_call.1} parent=39 // pred_region
          %231 = dma.done %s223, 128
        $region44: #{tpu_custom_call.1} parent=39 // pred_fallthru
          _
        // Predicated region
        $region45: #{tpu_custom_call.1} parent=39 // pred_check
          %p232 = pneg %p65
        $region46: #{tpu_custom_call.1} parent=39 // pred_check_branch
          %234 = sbr.rel (%p232) target = $region48
        $region47: #{tpu_custom_call.1} parent=39 // pred_region
          %236 = dma.done [#allocation6], 512
        $region48: #{tpu_custom_call.1} parent=39 // pred_fallthru
          _
        %s237 = sand.u32 %s31, 1
        %s238 = scalar_lea.sflag [#allocation3], %s237
        %s239 = sand.u32 %s31, 1
        %s240 = smul.addr %s239, 8
        %s241 = scalar_lea.vmem [#allocation2], %s240
        %p242 = pneg %p44
        %p243 = pneg %p41
        %p244 = pneg %p65
        %p245 = pneg %p62
        %p246 = pneg %p86
        %p247 = pneg %p83
        %p248 = pneg %p107
        %p249 = pneg %p104
        %p250 = pneg %p128
        %p251 = pneg %p125
        %p252 = pneg %p154
        %p253 = pneg %p151
        %s254 = sand.u32 %s141, 1
        %s255 = scalar_lea.sflag [#allocation4], %s254
        %s256 = sand.u32 %s141, 1
        %s257 = smul.addr %s256, 8
        %s258 = scalar_lea.vmem [#allocation7], %s257
        %v259 = vld [vmem:[%s226] sm:$0xff]
        %v260 = vld [vmem:[#allocation5] sm:$0xff]
        %v261 = vld [vmem:[#allocation5 + $0x8] sm:$0xff]
        %v262 = vld [vmem:[#allocation5 + $0x10] sm:$0xff]
        %v263 = vld [vmem:[#allocation5 + $0x18] sm:$0xff]
        %v264 = vld [vmem:[%s2] sm:$0x1]
        %v266 = vperm.slane %v264, 0
        %vm268 = vcmask 261120
        %v270 = vsel %vm268, %v259, 0
        %272 = vmatpush.msra.mxu0 0.0
        %273 = vmatpush.msra.mxu0 0.0
        %274 = vmatpush.msra.mxu0 0.0
        %275 = vmatpush.msra.mxu0 0.0
        %276 = vmatpush.msra.mxu0 0.0
        %277 = vmatpush.msra.mxu0 0.0
        %278 = vmatpush.msra.mxu0 0.0
        %279 = vmatpush.msra.mxu0 0.0
        %280 = vmatpush.msra.mxu0 0.0
        %281 = vmatpush.msra.mxu0 0.0
        %282 = vmatpush.msra.mxu0 0.0
        %283 = vmatpush.msra.mxu0 0.0
        %284 = vmatpush.msra.mxu0 %v263
        %285 = vmatpush.msra.mxu0 %v262
        %286 = vmatpush.msra.mxu0 %v261
        %287 = vmatpush.msra.mxu0 %v260
        %288 = vmatmul.f32.gmra.mxu0 %v270
        %v289 = vpop.f32.mrf.mxu0
        %v290 = vadd.f32 %v266, %v289
        %291 = vdwg.mxu0
        %v292 = vmul.f32 %v290, 0.5
        %v293 = vmul.f32 %v290, 0.70710677
        %v294 = vand.u32 2147483647, %v293
        %v295 = vmul.f32 %v294, 0.3275911
        %v296 = vadd.f32 %v295, 1.0
        %v297 = vrcp.pop %v296
        %v298 = vmul.f32 %v296, %v297
        %v299 = vsub.f32 2.0, %v298
        %v300 = vmul.f32 %v297, %v299
        %v301 = vmul.f32 %v300, 1.0614054
        %v302 = vadd.f32 %v301, -1.4531521
        %v303 = vmul.f32 %v302, %v300
        %v304 = vadd.f32 %v303, 1.4214138
        %v305 = vmul.f32 %v304, %v300
        %v306 = vadd.f32 %v305, -0.28449672
        %v307 = vmul.f32 %v306, %v300
        %v308 = vadd.f32 %v307, 0.2548296
        %v309 = vmul.f32 %v308, %v300
        %v310 = vsub.f32 0.0, %v294
        %v311 = vmul.f32 %v310, %v294
        %v312 = vmul.f32 %v311, 1.442695
        %v313 = vpow.pop %v312
        %v314 = vmul.f32 %v309, %v313
        %v315 = vsub.f32 1.0, %v314
        %vm316 = vcmp.lt.f32.partialorder %v293, 0.0
        %v317 = vsub.f32 0.0, %v315
        %v318 = vsel %vm316, %v317, %v315
        %v319 = vadd.f32 %v318, 1.0
        %v320 = vmul.f32 %v292, %v319
        %v321 = vsel %vm268, %v320, 0.0
        %322 = vadd.xlane.f32.xlu0 %v321
        %v323 = vpop.xlane.xlu0 %322
        %v324 = vmul.f32 %v320, %v320
        %v325 = vsel %vm268, %v324, 0.0
        %326 = vadd.xlane.f32.xlu0 %v325
        %v327 = vpop.xlane.xlu0 %326
        %v328 = vmul.f32 %v323, 0.03125
        %v329 = vmul.f32 %v327, 0.03125
        %v330 = vmul.f32 %v328, %v328
        %v331 = vsub.f32 %v329, %v330
        %v332 = vmax.f32 %v331, 0.0
        %v333 = vsub.f32 %v320, %v328
        %v334 = vadd.f32 %v332, 1e-12
        %v335 = vrsqrt.pop %v334
        %v336 = vmul.f32 %v335, %v334
        %v337 = vmul.f32 %v336, %v335
        %v338 = vmul.f32 0.5, %v337
        %v339 = vsub.f32 1.5, %v338
        %v340 = vmul.f32 %v335, %v339
        %vm341 = vweird.f32 %v334
        %vm342 = vweird.f32 %v335
        %vm343 = vmor %vm341, %vm342
        %v344 = vsel %vm343, %v335, %v340
        %v345 = vmul.f32 %v333, %v344
        %v346 = vld [vmem:[%s3] sm:$0x1]
        %v348 = vperm.slane %v346, 0
        %v350 = vmul.f32 %v345, %v348
        %v351 = vld [vmem:[%s4] sm:$0x1]
        %v353 = vperm.slane %v351, 0
        %v355 = vadd.f32 %v350, %v353
        %356 = vst.msk [vmem:[%s258] sm:$0xff] %vm268, %v355
        %s357 = sand.u32 %s141, 1
        %s358 = scalar_lea.sflag [#allocation4], %s357
        %s359 = sand.u32 %s141, 1
        %s360 = smul.addr %s359, 8
        %s361 = scalar_lea.vmem [#allocation7], %s360
        // Predicated region
        $region49: #{tpu_custom_call.1} parent=39 // pred_check
          %p362 = pneg %p151
        $region50: #{tpu_custom_call.1} parent=39 // pred_check_branch
          %364 = sbr.rel (%p362) target = $region52
        $region51: #{tpu_custom_call.1} parent=39 // pred_region
          %366 = vsyncadd %s358, 0
          %s367 = smul.addr %s23, 8
          %s368 = scalar_lea.hbm %s5, %s367
          %s370 = sshll.u32 %s361, 4
          %s371 = int_to_ptr.vmem [resolvable:$true] %s370
          %s372 = sshll.u32 %s368, 4
          %s373 = int_to_ptr.hbm [resolvable:$true] %s372
          %375 = dma.vmem_to_hbm [thread:$0]  %s371, 128, %s373, %s358
        $region52: #{tpu_custom_call.1} parent=39 // pred_fallthru
          _
      $region40: #{tpu_custom_call.1} parent=5 // pred_fallthru
        _
      %p376 = scmp.le.s32.totalorder 2, %s18
      // Predicated region
      $region53: #{tpu_custom_call.1} parent=5 // pred_check
        %p377 = pneg %p376
      $region54: #{tpu_custom_call.1} parent=5 // pred_check_branch
        %379 = sbr.rel (%p377) target = $region56
      $region55: #{tpu_custom_call.1} parent=5 // pred_region
        %s380 = ssub.s32 %s18, 2
        // Predicated region
        $region57: #{tpu_custom_call.1} parent=55 // pred_check
          %p381 = pneg %p157
        $region58: #{tpu_custom_call.1} parent=55 // pred_check_branch
          %383 = sbr.rel (%p381) target = $region60
        $region59: #{tpu_custom_call.1} parent=55 // pred_region
          %s384 = sand.u32 %s142, 1
          %s385 = scalar_lea.sflag [#allocation4], %s384
          %s386 = sand.u32 %s142, 1
          %s387 = smul.addr %s386, 8
          %s388 = scalar_lea.vmem [#allocation7], %s387
          %390 = dma.done %s385, 128
        $region60: #{tpu_custom_call.1} parent=55 // pred_fallthru
          _
      $region56: #{tpu_custom_call.1} parent=5 // pred_fallthru
        _
    $region6: #{tpu_custom_call.1} parent=1 // loop_footer
      %s22 = sadd.s32 1, %s18
    $region7: #{tpu_custom_call.1} parent=1 // loop_footer_branch
      %17 = sbr.rel target = $region3
    $region8: #{tpu_custom_call.1} parent=1 // loop_exit
      _
    %391 = vsyncpa [#allocation3], 1
    %s392 = scalar_lea.sflag [#allocation3], 1
    %393 = vsyncpa %s392, 1
    %394 = vsyncpa [#allocation6], 1
    %395 = vsyncpa [#allocation4], 1
    %s396 = scalar_lea.sflag [#allocation4], 1
    %397 = vsyncpa %s396, 1

</llo_original>
